<compile_context>
chip_gen: v6e
topology: v6e:2x2x1
jax: 0.10.0
libtpu: 0.0.40
codegen_flags: <defaults>
</compile_context>

<pallas_src>
import functools

import jax
import jax.numpy as jnp
from jax.experimental import pallas as pl
from jax.experimental.pallas import tpu as pltpu


def _round_up(x, m):
    return ((x + m - 1) // m) * m


def attention_kernel(inp_ref, src_ref, win_ref, wmix_ref, winp_ref,
                     out_ref, attn_ref, *, source_len):
    # inp_ref  : (Bblk, Tp, Din_p)   block of `input` (zero padded)
    # src_ref  : (Bblk, Sp, Dsrc_p)  block of `source_hids` (zero padded)
    # win_ref  : (Din_p, Dsrc_p)     input_proj.weight, pre-transposed + padded
    # wmix_ref : (Dsrc_p, Dout_p)    output_proj.weight[:, :Dsrc]^T, padded
    # winp_ref : (Din_p, Dout_p)     output_proj.weight[:, Dsrc:]^T, padded
    bblk, tp, din = inp_ref.shape
    _, sp, dsrc = src_ref.shape
    dout = out_ref.shape[-1]

    inp = inp_ref[...]                                   # (Bblk, Tp, Din_p)
    src = src_ref[...]                                   # (Bblk, Sp, Dsrc_p)
    inp2 = inp.reshape(bblk * tp, din)                   # flatten -> big MXU pass

    # x = input_proj(input)
    x = jnp.dot(inp2, win_ref[...],
                preferred_element_type=jnp.float32)      # (Bblk*Tp, Dsrc_p)
    x = x.reshape(bblk, tp, dsrc)

    # scores = bmm(x, source_hids^T): contract last axes, no explicit transpose.
    scores = jax.lax.dot_general(
        x, src, (((2,), (2,)), ((0,), (0,))),
        preferred_element_type=jnp.float32)              # (Bblk, Tp, Sp)

    # Mask the zero-padded source positions before the softmax.
    kidx = jax.lax.broadcasted_iota(jnp.int32, scores.shape, 2)
    scores = jnp.where(kidx < source_len, scores, -1e30)

    # softmax over the source axis (lane axis, fully dense Sp = multiple of 128)
    m = jnp.max(scores, axis=-1, keepdims=True)
    p = jnp.exp(scores - m)
    attn = p * pl.reciprocal(jnp.sum(p, axis=-1, keepdims=True), approx=False)
    attn_ref[...] = attn.astype(attn_ref.dtype)          # lane-dense store

    # mix = bmm(attn, source_hids)
    mix = jax.lax.dot_general(
        attn, src, (((2,), (1,)), ((0,), (0,))),
        preferred_element_type=jnp.float32)              # (Bblk, Tp, Dsrc_p)

    # output = tanh(output_proj(cat(mix, input)))
    #        = tanh(mix @ Wout[:, :Dsrc]^T + input @ Wout[:, Dsrc:]^T)
    mix2 = mix.reshape(bblk * tp, dsrc)
    out = (jnp.dot(mix2, wmix_ref[...], preferred_element_type=jnp.float32) +
           jnp.dot(inp2, winp_ref[...], preferred_element_type=jnp.float32))
    out_ref[...] = jnp.tanh(out).reshape(bblk, tp, dout).astype(out_ref.dtype)


def attention_forward(inp, src, w_in, w_out, *, block_b=None):
    """inp: (B,T,Din), src: (B,S,Dsrc), w_in: (Dsrc,Din), w_out: (Dout,Dsrc+Din)."""
    B, T, Din = inp.shape
    _, S, Dsrc = src.shape
    Dout = w_out.shape[0]

    # Batch block: amortize per-step overhead but keep >= 2 grid steps when
    # possible so both v7x TensorCores (megacore) get work.
    if block_b is None:
        block_b = 1
        for cand in (16, 8, 4, 2):
            if B % cand == 0 and B // cand >= 2:
                block_b = cand
                break
    assert B % block_b == 0
    nb = B // block_b

    # Lane-dense padded sizes.
    Tp = _round_up(T, 8)
    Sp = _round_up(S, 128)
    Din_p = _round_up(Din, 128)
    Dsrc_p = _round_up(Dsrc, 128)
    Dout_p = _round_up(Dout, 128)

    # Host-side zero padding (cheap; keeps every kernel tile (8,128)-aligned).
    inp_p = jnp.pad(inp, ((0, 0), (0, Tp - T), (0, Din_p - Din)))
    src_p = jnp.pad(src, ((0, 0), (0, Sp - S), (0, Dsrc_p - Dsrc)))

    win_p = jnp.pad(w_in, ((0, Dsrc_p - Dsrc), (0, Din_p - Din))).T      # (Din_p, Dsrc_p)
    wmix = w_out[:, :Dsrc]                                               # (Dout, Dsrc)
    winp = w_out[:, Dsrc:]                                               # (Dout, Din)
    wmix_p = jnp.pad(wmix, ((0, Dout_p - Dout), (0, Dsrc_p - Dsrc))).T   # (Dsrc_p, Dout_p)
    winp_p = jnp.pad(winp, ((0, Dout_p - Dout), (0, Din_p - Din))).T     # (Din_p, Dout_p)

    kernel = functools.partial(attention_kernel, source_len=S)

    out_p, attn_p = pl.pallas_call(
        kernel,
        out_shape=(jax.ShapeDtypeStruct((B, Tp, Dout_p), inp.dtype),
                   jax.ShapeDtypeStruct((B, Tp, Sp), inp.dtype)),
        grid=(nb,),
        in_specs=[
            pl.BlockSpec((block_b, Tp, Din_p), lambda b: (b, 0, 0)),
            pl.BlockSpec((block_b, Sp, Dsrc_p), lambda b: (b, 0, 0)),
            pl.BlockSpec((Din_p, Dsrc_p), lambda b: (0, 0)),
            pl.BlockSpec((Dsrc_p, Dout_p), lambda b: (0, 0)),
            pl.BlockSpec((Din_p, Dout_p), lambda b: (0, 0)),
        ],
        out_specs=(
            pl.BlockSpec((block_b, Tp, Dout_p), lambda b: (b, 0, 0)),
            pl.BlockSpec((block_b, Tp, Sp), lambda b: (b, 0, 0)),
        ),
        compiler_params=pltpu.CompilerParams(
            dimension_semantics=("parallel",),
            vmem_limit_bytes=32 * 1024 * 1024),
    )(inp_p, src_p, win_p, wmix_p, winp_p)

    # Strip padding.
    return out_p[:, :T, :Dout], attn_p[:, :T, :S]


def attention_reference(inp, src, w_in, w_out):
    """Pure-JAX mirror of the PyTorch forward, for validation."""
    x = jnp.einsum('btd,sd->bts', inp, w_in)                # input_proj
    scores = jnp.einsum('bts,bks->btk', x, src)             # bmm(x, src^T)
    attn = jax.nn.softmax(scores, axis=-1)
    mix = jnp.einsum('btk,bks->bts', attn, src)             # bmm(attn, src)
    combined = jnp.concatenate([mix, inp], axis=-1)
    out = jnp.tanh(jnp.einsum('btc,oc->bto', combined, w_out))
    return out, attn


def _make_case(key, B, T, S, input_dim, source_dim, output_dim):
    k_inp, k_src, k_win, k_wout = jax.random.split(key, 4)
    inp = jax.random.normal(k_inp, (B, T, input_dim), dtype=jnp.float32)
    src = jax.random.normal(k_src, (B, S, source_dim), dtype=jnp.float32)
    # nn.Linear default init: U(-1/sqrt(fan_in), 1/sqrt(fan_in)), bias=False.
    b_in = 1.0 / (input_dim ** 0.5)
    w_in = jax.random.uniform(k_win, (source_dim, input_dim),
                              minval=-b_in, maxval=b_in, dtype=jnp.float32)
    b_out = 1.0 / ((input_dim + source_dim) ** 0.5)
    w_out = jax.random.uniform(k_wout, (output_dim, input_dim + source_dim),
                               minval=-b_out, maxval=b_out, dtype=jnp.float32)
    return inp, src, w_in, w_out


if __name__ == "__main__":
    key = jax.random.PRNGKey(0)
    k1, k2 = jax.random.split(key)

    cases = [
        # (B, T, S, input_dim, source_dim, output_dim)
        (2, 8, 8, 32, 32, 32),      # shapes implied by the module defaults
        (8, 6, 20, 48, 24, 40),     # exercises batch-blocking + padding paths
    ]

    for k, (B, T, S, din, dsrc, dout) in zip((k1, k2), cases):
        inp, src, w_in, w_out = _make_case(k, B, T, S, din, dsrc, dout)

        out, attn = attention_forward(inp, src, w_in, w_out)
        out = jax.block_until_ready(out)
        attn = jax.block_until_ready(attn)

        out_ref, attn_ref = attention_reference(inp, src, w_in, w_out)
        assert jnp.allclose(out, out_ref, atol=1e-5, rtol=1e-4), "output mismatch"
        assert jnp.allclose(attn, attn_ref, atol=1e-5, rtol=1e-4), "attn mismatch"

    print("KERNEL_OK")
</pallas_src>

<mosaic_0001>
module attributes {stable_mosaic.version = 11 : i64} {
  func.func @attention_kernel(%arg0: i32, %arg1: memref<1x8x128xf32, #tpu.memory_space<vmem>>, %arg2: memref<1x128x128xf32, #tpu.memory_space<vmem>>, %arg3: memref<128x128xf32, #tpu.memory_space<vmem>>, %arg4: memref<128x128xf32, #tpu.memory_space<vmem>>, %arg5: memref<128x128xf32, #tpu.memory_space<vmem>>, %arg6: memref<1x8x128xf32, #tpu.memory_space<vmem>>, %arg7: memref<1x8x128xf32, #tpu.memory_space<vmem>>) attributes {dimension_semantics = [#tpu.dimension_semantics<parallel>], iteration_bounds = array<i64: 2>, scalar_prefetch = 0 : i64, scratch_operands = 0 : i64, tpu.core_type = #tpu.core_type<tc>, window_params = [{transform_indices = @transform_0, window_bounds = array<i64: 1, 8, 128>}, {transform_indices = @transform_1, window_bounds = array<i64: 1, 128, 128>}, {pipeline_mode = #tpu.pipeline_mode<synchronous>, transform_indices = @transform_2, window_bounds = array<i64: 128, 128>}, {pipeline_mode = #tpu.pipeline_mode<synchronous>, transform_indices = @transform_3, window_bounds = array<i64: 128, 128>}, {pipeline_mode = #tpu.pipeline_mode<synchronous>, transform_indices = @transform_4, window_bounds = array<i64: 128, 128>}, {transform_indices = @transform_5, window_bounds = array<i64: 1, 8, 128>}, {transform_indices = @transform_6, window_bounds = array<i64: 1, 8, 128>}]} {
    %c0 = arith.constant 0 : index
    %c0_0 = arith.constant 0 : index
    %c0_1 = arith.constant 0 : index
    %0 = vector.load %arg1[%c0, %c0_0, %c0_1] : memref<1x8x128xf32, #tpu.memory_space<vmem>>, vector<1x8x128xf32>
    %c0_2 = arith.constant 0 : index
    %c0_3 = arith.constant 0 : index
    %c0_4 = arith.constant 0 : index
    %1 = vector.load %arg2[%c0_2, %c0_3, %c0_4] : memref<1x128x128xf32, #tpu.memory_space<vmem>>, vector<1x128x128xf32>
    %2 = vector.shape_cast %0 : vector<1x8x128xf32> to vector<8x128xf32>
    %c0_5 = arith.constant 0 : index
    %c0_6 = arith.constant 0 : index
    %3 = vector.load %arg3[%c0_5, %c0_6] : memref<128x128xf32, #tpu.memory_space<vmem>>, vector<128x128xf32>
    %cst = arith.constant dense<0.000000e+00> : vector<8x128xf32>
    %4 = tpu.matmul %2, %3, %cst {dimension_numbers = #tpu.dot_dimension_numbers<[1], [0], [0], [1], [0, 0, 1, 1], [], []>} : vector<8x128xf32>, vector<128x128xf32>, vector<8x128xf32> -> vector<8x128xf32>
    %5 = vector.shape_cast %4 : vector<8x128xf32> to vector<1x8x128xf32>
    %cst_7 = arith.constant dense<0.000000e+00> : vector<1x8x128xf32>
    %6 = tpu.matmul %5, %1, %cst_7 {dimension_numbers = #tpu.dot_dimension_numbers<[2], [2], [1], [1], [0, 0, 0, 1, 1, 1], [0], [0]>} : vector<1x8x128xf32>, vector<1x128x128xf32>, vector<1x8x128xf32> -> vector<1x8x128xf32>
    %7 = tpu.iota {dimensions = array<i32: 2>} : vector<1x8x128xi32>
    %c8_i32 = arith.constant 8 : i32
    %8 = vector.broadcast %c8_i32 : i32 to vector<1x8x128xi32>
    %9 = arith.cmpi slt, %7, %8 : vector<1x8x128xi32>
    %cst_8 = arith.constant -1.000000e+30 : f32
    %10 = vector.broadcast %cst_8 : f32 to vector<1x8x128xf32>
    %11 = arith.select %9, %6, %10 : vector<1x8x128xi1>, vector<1x8x128xf32>
    %cst_9 = arith.constant dense<0xFF800000> : vector<1x8xf32>
    %12 = vector.multi_reduction <maximumf>, %11, %cst_9 [2] : vector<1x8x128xf32> to vector<1x8xf32>
    %13 = vector.shape_cast %12 : vector<1x8xf32> to vector<1x8x1xf32>
    %14 = vector.broadcast %13 : vector<1x8x1xf32> to vector<1x8x128xf32>
    %15 = arith.subf %11, %14 : vector<1x8x128xf32>
    %16 = math.exp %15 : vector<1x8x128xf32>
    %cst_10 = arith.constant dense<0.000000e+00> : vector<1x8xf32>
    %17 = vector.multi_reduction <add>, %16, %cst_10 [2] : vector<1x8x128xf32> to vector<1x8xf32>
    %18 = vector.shape_cast %17 : vector<1x8xf32> to vector<1x8x1xf32>
    %19 = tpu.reciprocal %18 : vector<1x8x1xf32> -> vector<1x8x1xf32>
    %20 = vector.broadcast %19 : vector<1x8x1xf32> to vector<1x8x128xf32>
    %21 = arith.mulf %16, %20 : vector<1x8x128xf32>
    %c0_11 = arith.constant 0 : index
    %c0_12 = arith.constant 0 : index
    %c0_13 = arith.constant 0 : index
    %22 = vector.load %arg7[%c0_11, %c0_12, %c0_13] : memref<1x8x128xf32, #tpu.memory_space<vmem>>, vector<1x8x128xf32>
    tpu.vector_store %arg7[%c0_11, %c0_12, %c0_13], %21 {strides = array<i32>} : memref<1x8x128xf32, #tpu.memory_space<vmem>>, vector<1x8x128xf32>,
    %cst_14 = arith.constant dense<0.000000e+00> : vector<1x8x128xf32>
    %23 = tpu.matmul %21, %1, %cst_14 {dimension_numbers = #tpu.dot_dimension_numbers<[2], [1], [1], [2], [0, 0, 0, 1, 1, 2], [0], [0]>} : vector<1x8x128xf32>, vector<1x128x128xf32>, vector<1x8x128xf32> -> vector<1x8x128xf32>
    %24 = vector.shape_cast %23 : vector<1x8x128xf32> to vector<8x128xf32>
    %c0_15 = arith.constant 0 : index
    %c0_16 = arith.constant 0 : index
    %25 = vector.load %arg4[%c0_15, %c0_16] : memref<128x128xf32, #tpu.memory_space<vmem>>, vector<128x128xf32>
    %cst_17 = arith.constant dense<0.000000e+00> : vector<8x128xf32>
    %26 = tpu.matmul %24, %25, %cst_17 {dimension_numbers = #tpu.dot_dimension_numbers<[1], [0], [0], [1], [0, 0, 1, 1], [], []>} : vector<8x128xf32>, vector<128x128xf32>, vector<8x128xf32> -> vector<8x128xf32>
    %c0_18 = arith.constant 0 : index
    %c0_19 = arith.constant 0 : index
    %27 = vector.load %arg5[%c0_18, %c0_19] : memref<128x128xf32, #tpu.memory_space<vmem>>, vector<128x128xf32>
    %cst_20 = arith.constant dense<0.000000e+00> : vector<8x128xf32>
    %28 = tpu.matmul %2, %27, %cst_20 {dimension_numbers = #tpu.dot_dimension_numbers<[1], [0], [0], [1], [0, 0, 1, 1], [], []>} : vector<8x128xf32>, vector<128x128xf32>, vector<8x128xf32> -> vector<8x128xf32>
    %29 = arith.addf %26, %28 : vector<8x128xf32>
    %30 = math.tanh %29 : vector<8x128xf32>
    %31 = vector.shape_cast %30 : vector<8x128xf32> to vector<1x8x128xf32>
    %c0_21 = arith.constant 0 : index
    %c0_22 = arith.constant 0 : index
    %c0_23 = arith.constant 0 : index
    %32 = vector.load %arg6[%c0_21, %c0_22, %c0_23] : memref<1x8x128xf32, #tpu.memory_space<vmem>>, vector<1x8x128xf32>
    tpu.vector_store %arg6[%c0_21, %c0_22, %c0_23], %31 {strides = array<i32>} : memref<1x8x128xf32, #tpu.memory_space<vmem>>, vector<1x8x128xf32>,
    return
  }
  func.func @transform_0(%arg0: i32) -> (i32, i32, i32) {
    %c0_i32 = arith.constant 0 : i32
    %c0_i32_0 = arith.constant 0 : i32
    %c0_i32_1 = arith.constant 0 : i32
    return %arg0, %c0_i32, %c0_i32_0 : i32, i32, i32
  }
  func.func @transform_1(%arg0: i32) -> (i32, i32, i32) {
    %c0_i32 = arith.constant 0 : i32
    %c0_i32_0 = arith.constant 0 : i32
    %c0_i32_1 = arith.constant 0 : i32
    return %arg0, %c0_i32, %c0_i32_0 : i32, i32, i32
  }
  func.func @transform_2(%arg0: i32) -> (i32, i32) {
    %c0_i32 = arith.constant 0 : i32
    %c0_i32_0 = arith.constant 0 : i32
    %c0_i32_1 = arith.constant 0 : i32
    return %c0_i32, %c0_i32_0 : i32, i32
  }
  func.func @transform_3(%arg0: i32) -> (i32, i32) {
    %c0_i32 = arith.constant 0 : i32
    %c0_i32_0 = arith.constant 0 : i32
    %c0_i32_1 = arith.constant 0 : i32
    return %c0_i32, %c0_i32_0 : i32, i32
  }
  func.func @transform_4(%arg0: i32) -> (i32, i32) {
    %c0_i32 = arith.constant 0 : i32
    %c0_i32_0 = arith.constant 0 : i32
    %c0_i32_1 = arith.constant 0 : i32
    return %c0_i32, %c0_i32_0 : i32, i32
  }
  func.func @transform_5(%arg0: i32) -> (i32, i32, i32) {
    %c0_i32 = arith.constant 0 : i32
    %c0_i32_0 = arith.constant 0 : i32
    %c0_i32_1 = arith.constant 0 : i32
    return %arg0, %c0_i32, %c0_i32_0 : i32, i32, i32
  }
  func.func @transform_6(%arg0: i32) -> (i32, i32, i32) {
    %c0_i32 = arith.constant 0 : i32
    %c0_i32_0 = arith.constant 0 : i32
    %c0_i32_1 = arith.constant 0 : i32
    return %arg0, %c0_i32, %c0_i32_0 : i32, i32, i32
  }
}

</mosaic_0001>

<llo_original>
// kernel: tpu_custom_call.1
$region0: #{tpu_custom_call.1}
  #allocation0 [shape = 'u32[]', space=smem, size = 0x4, offset = 0x4, fixed_abs, tag = 'smem constant byte address 0x4 - core index']
  #allocation1 [shape = 'u32[144,128]{1,0:T(1,128)}', space=vmem, size = 0x12000, scoped, tag = 'internal scratch']
  %s0 = inlined_call_operand.hbm [shape: f32[2,8,128], index: 0, kind: input, shape index: {}]
  %s1 = inlined_call_operand.hbm [shape: f32[2,128,128], index: 1, kind: input, shape index: {}]
  %s2 = inlined_call_operand.hbm [shape: f32[128,128], index: 2, kind: input, shape index: {}]
  %s3 = inlined_call_operand.hbm [shape: f32[128,128], index: 3, kind: input, shape index: {}]
  %s4 = inlined_call_operand.hbm [shape: f32[128,128], index: 4, kind: input, shape index: {}]
  %s5 = inlined_call_operand.hbm [shape: f32[2,8,128], index: 5, kind: output, shape index: {0}]
  %s6 = inlined_call_operand.hbm [shape: f32[2,8,128], index: 6, kind: output, shape index: {1}]
  %7 = xla_tuple %s5, %s6
  %s8 = sld [smem:[#allocation0]]
  $region81: #{tpu_custom_call.1} parent=0
    _
  %s10 = ssub.s32 1, %s8
  %s11 = scalar_select 0, %s10, %s8
  $region1: #{tpu_custom_call.1} parent=0
    #allocation2 [shape = 'u8[8192]{0}', space=vmem, size = 0x2000, scoped, tag = 'input window, operand 0']
    #allocation3 [shape = 's32[2]{0}', space=sflag, size = 0x8, scoped, tag = 'scoped memory for tpu_custom_call.1']
    #allocation4 [shape = 's32[2]{0}', space=sflag, size = 0x8, scoped, tag = 'scoped memory for tpu_custom_call.1']
    #allocation5 [shape = 'u8[131072]{0}', space=vmem, size = 0x20000, scoped, tag = 'input window, operand 1']
    #allocation6 [shape = 's32[2]{0}', space=sflag, size = 0x8, scoped, tag = 'scoped memory for tpu_custom_call.1']
    #allocation7 [shape = 'u8[65536]{0}', space=vmem, size = 0x10000, scoped, tag = 'input window, operand 2, single buffered']
    #allocation8 [shape = 'u8[65536]{0}', space=vmem, size = 0x10000, scoped, tag = 'input window, operand 3, single buffered']
    #allocation9 [shape = 's32[1]{0}', space=sflag, size = 0x4, scoped, tag = 'scoped memory for tpu_custom_call.1']
    #allocation10 [shape = 'u8[65536]{0}', space=vmem, size = 0x10000, scoped, tag = 'input window, operand 4, single buffered']
    #allocation11 [shape = 'u8[8192]{0}', space=vmem, size = 0x2000, scoped, tag = 'output window, operand 0']
    #allocation12 [shape = 'u8[8192]{0}', space=vmem, size = 0x2000, scoped, tag = 'output window, operand 1']
    #allocation13 [shape = 's32[2]{0}', space=sflag, size = 0x8, scoped, tag = 'scoped memory for tpu_custom_call.1']
    %12 = vsyncpa [#allocation3], 0
    %s13 = scalar_lea.sflag [#allocation3], 1
    %14 = vsyncpa %s13, 0
    %15 = vsyncpa [#allocation6], 0
    %s16 = scalar_lea.sflag [#allocation6], 1
    %17 = vsyncpa %s16, 0
    %18 = vsyncpa [#allocation9], 0
    %19 = vsyncpa [#allocation4], 0
    %s20 = scalar_lea.sflag [#allocation4], 1
    %21 = vsyncpa %s20, 0
    %22 = vsyncpa [#allocation13], 0
    %s23 = scalar_lea.sflag [#allocation13], 1
    %24 = vsyncpa %s23, 0
    loop: start=0, step=1, limit=4
    $region2: #{tpu_custom_call.1} parent=1 // loop_pre_header
      _
    $region3: #{tpu_custom_call.1} parent=1 // loop_header
      %s26 = sphi 0, %s30
      %p27 = scmp.ge.s32.totalorder %s26, 4
      %s36 = sphi 0, %s38
      %s39 = sphi 0, %s36
      %s40 = sphi 0, %s39
      %s56 = sphi 0, %s40
      %s62 = sphi 0, %s64
      %s65 = sphi 0, %s62
      %s66 = sphi 0, %s65
      %s82 = sphi 0, %s66
      %s86 = sphi 0, %s86
      %s88 = sphi 0, %s86
      %s89 = sphi 0, %s88
      %s103 = sphi 0, %s89
      %s107 = sphi 0, %s107
      %s109 = sphi 0, %s107
      %s110 = sphi 0, %s109
      %s124 = sphi 0, %s110
      %s128 = sphi 0, %s128
      %s130 = sphi 0, %s128
      %s131 = sphi 0, %s130
      %s145 = sphi 0, %s131
      %s151 = sphi 0, %s153
      %s154 = sphi 0, %s151
      %s155 = sphi 0, %s154
      %s171 = sphi 0, %s155
      %s177 = sphi 0, %s179
      %s180 = sphi 0, %s177
      %s181 = sphi 0, %s180
      %s197 = sphi 0, %s181
    $region4: #{tpu_custom_call.1} parent=1 // loop_header_branch
      %29 = sbr.rel (%p27) target = $region8
    $region5: #{tpu_custom_call.1} parent=1 // loop_body
      %s31 = ssub.s32 %s26, 1
      %s32 = ssub.s32 %s26, 2
      %s33 = sadd.s32 %s26, 1
      %s34 = ssub.s32 %s26, %s33
      %p35 = scmp.eq.s32.totalorder %s34, 0
      %s37 = sadd.s32 %s36, 1
      %s38 = scalar_select %p35, %s36, %s37
      %p41 = pneg %p35
      %p42 = scmp.eq.s32.totalorder %s26, 1
      %p43 = por %p41, %p42
      %p44 = scmp.ne.s32.totalorder %s36, %s39
      %p45 = scmp.eq.s32.totalorder %s26, 0
      %p46 = por %p44, %p45
      %p47 = scmp.ne.s32.totalorder %s36, %s39
      %p48 = scmp.eq.s32.totalorder %s31, 1
      %p49 = por %p47, %p48
      %p50 = scmp.ne.s32.totalorder %s39, %s40
      %p51 = scmp.eq.s32.totalorder %s31, 0
      %p52 = por %p50, %p51
      %p53 = scmp.ne.s32.totalorder %s39, %s40
      %p54 = scmp.eq.s32.totalorder %s32, 1
      %p55 = por %p53, %p54
      %p57 = scmp.ne.s32.totalorder %s40, %s56
      %p58 = scmp.eq.s32.totalorder %s32, 0
      %p59 = por %p57, %p58
      %s60 = ssub.s32 %s26, %s33
      %p61 = scmp.eq.s32.totalorder %s60, 0
      %s63 = sadd.s32 %s62, 1
      %s64 = scalar_select %p61, %s62, %s63
      %p67 = pneg %p61
      %p68 = scmp.eq.s32.totalorder %s26, 1
      %p69 = por %p67, %p68
      %p70 = scmp.ne.s32.totalorder %s62, %s65
      %p71 = scmp.eq.s32.totalorder %s26, 0
      %p72 = por %p70, %p71
      %p73 = scmp.ne.s32.totalorder %s62, %s65
      %p74 = scmp.eq.s32.totalorder %s31, 1
      %p75 = por %p73, %p74
      %p76 = scmp.ne.s32.totalorder %s65, %s66
      %p77 = scmp.eq.s32.totalorder %s31, 0
      %p78 = por %p76, %p77
      %p79 = scmp.ne.s32.totalorder %s65, %s66
      %p80 = scmp.eq.s32.totalorder %s32, 1
      %p81 = por %p79, %p80
      %p83 = scmp.ne.s32.totalorder %s66, %s82
      %p84 = scmp.eq.s32.totalorder %s32, 0
      %p85 = por %p83, %p84
      %s87 = sadd.s32 %s86, 1
      %p90 = scmp.eq.s32.totalorder %s26, 1
      %p91 = scmp.ne.s32.totalorder %s86, %s88
      %p92 = scmp.eq.s32.totalorder %s26, 0
      %p93 = por %p91, %p92
      %p94 = scmp.ne.s32.totalorder %s86, %s88
      %p95 = scmp.eq.s32.totalorder %s31, 1
      %p96 = por %p94, %p95
      %p97 = scmp.ne.s32.totalorder %s88, %s89
      %p98 = scmp.eq.s32.totalorder %s31, 0
      %p99 = por %p97, %p98
      %p100 = scmp.ne.s32.totalorder %s88, %s89
      %p101 = scmp.eq.s32.totalorder %s32, 1
      %p102 = por %p100, %p101
      %p104 = scmp.ne.s32.totalorder %s89, %s103
      %p105 = scmp.eq.s32.totalorder %s32, 0
      %p106 = por %p104, %p105
      %s108 = sadd.s32 %s107, 1
      %p111 = scmp.eq.s32.totalorder %s26, 1
      %p112 = scmp.ne.s32.totalorder %s107, %s109
      %p113 = scmp.eq.s32.totalorder %s26, 0
      %p114 = por %p112, %p113
      %p115 = scmp.ne.s32.totalorder %s107, %s109
      %p116 = scmp.eq.s32.totalorder %s31, 1
      %p117 = por %p115, %p116
      %p118 = scmp.ne.s32.totalorder %s109, %s110
      %p119 = scmp.eq.s32.totalorder %s31, 0
      %p120 = por %p118, %p119
      %p121 = scmp.ne.s32.totalorder %s109, %s110
      %p122 = scmp.eq.s32.totalorder %s32, 1
      %p123 = por %p121, %p122
      %p125 = scmp.ne.s32.totalorder %s110, %s124
      %p126 = scmp.eq.s32.totalorder %s32, 0
      %p127 = por %p125, %p126
      %s129 = sadd.s32 %s128, 1
      %p132 = scmp.eq.s32.totalorder %s26, 1
      %p133 = scmp.ne.s32.totalorder %s128, %s130
      %p134 = scmp.eq.s32.totalorder %s26, 0
      %p135 = por %p133, %p134
      %p136 = scmp.ne.s32.totalorder %s128, %s130
      %p137 = scmp.eq.s32.totalorder %s31, 1
      %p138 = por %p136, %p137
      %p139 = scmp.ne.s32.totalorder %s130, %s131
      %p140 = scmp.eq.s32.totalorder %s31, 0
      %p141 = por %p139, %p140
      %p142 = scmp.ne.s32.totalorder %s130, %s131
      %p143 = scmp.eq.s32.totalorder %s32, 1
      %p144 = por %p142, %p143
      %p146 = scmp.ne.s32.totalorder %s131, %s145
      %p147 = scmp.eq.s32.totalorder %s32, 0
      %p148 = por %p146, %p147
      %s149 = ssub.s32 %s26, %s33
      %p150 = scmp.eq.s32.totalorder %s149, 0
      %s152 = sadd.s32 %s151, 1
      %s153 = scalar_select %p150, %s151, %s152
      %p156 = pneg %p150
      %p157 = scmp.eq.s32.totalorder %s26, 1
      %p158 = por %p156, %p157
      %p159 = scmp.ne.s32.totalorder %s151, %s154
      %p160 = scmp.eq.s32.totalorder %s26, 0
      %p161 = por %p159, %p160
      %p162 = scmp.ne.s32.totalorder %s151, %s154
      %p163 = scmp.eq.s32.totalorder %s31, 1
      %p164 = por %p162, %p163
      %p165 = scmp.ne.s32.totalorder %s154, %s155
      %p166 = scmp.eq.s32.totalorder %s31, 0
      %p167 = por %p165, %p166
      %p168 = scmp.ne.s32.totalorder %s154, %s155
      %p169 = scmp.eq.s32.totalorder %s32, 1
      %p170 = por %p168, %p169
      %p172 = scmp.ne.s32.totalorder %s155, %s171
      %p173 = scmp.eq.s32.totalorder %s32, 0
      %p174 = por %p172, %p173
      %s175 = ssub.s32 %s26, %s33
      %p176 = scmp.eq.s32.totalorder %s175, 0
      %s178 = sadd.s32 %s177, 1
      %s179 = scalar_select %p176, %s177, %s178
      %p182 = pneg %p176
      %p183 = scmp.eq.s32.totalorder %s26, 1
      %p184 = por %p182, %p183
      %p185 = scmp.ne.s32.totalorder %s177, %s180
      %p186 = scmp.eq.s32.totalorder %s26, 0
      %p187 = por %p185, %p186
      %p188 = scmp.ne.s32.totalorder %s177, %s180
      %p189 = scmp.eq.s32.totalorder %s31, 1
      %p190 = por %p188, %p189
      %p191 = scmp.ne.s32.totalorder %s180, %s181
      %p192 = scmp.eq.s32.totalorder %s31, 0
      %p193 = por %p191, %p192
      %p194 = scmp.ne.s32.totalorder %s180, %s181
      %p195 = scmp.eq.s32.totalorder %s32, 1
      %p196 = por %p194, %p195
      %p198 = scmp.ne.s32.totalorder %s181, %s197
      %p199 = scmp.eq.s32.totalorder %s32, 0
      %p200 = por %p198, %p199
      %p201 = scmp.le.s32.totalorder 1, %s26
      %p202 = scmp.lt.s32.totalorder %s26, 3
      %p203 = pnand %p201, %p202
      %p204 = pneg %p203
      // Predicated region
      $region9: #{tpu_custom_call.1} parent=5 // pred_check
        _
      $region10: #{tpu_custom_call.1} parent=5 // pred_check_branch
        %206 = sbr.rel (%p203) target = $region12
      $region11: #{tpu_custom_call.1} parent=5 // pred_region
        %s207 = ssub.s32 %s26, 1
        // Predicated region
        $region13: #{tpu_custom_call.1} parent=11 // pred_check
          %p208 = pneg %p99
        $region14: #{tpu_custom_call.1} parent=11 // pred_check_branch
          %210 = sbr.rel (%p208) target = $region16
        $region15: #{tpu_custom_call.1} parent=11 // pred_region
          %s212 = ssub.s32 2048, 2048
          %213 = vsyncadd [#allocation6], %s212
          %s214 = sshll.u32 [#allocation7], 4
          %s215 = int_to_ptr.vmem [resolvable:$true] %s214
          %220 = dma.hbm_to_vmem [thread:$0]  %s2, 2048, %s215, [#allocation6], 128, 128, 8
        $region16: #{tpu_custom_call.1} parent=11 // pred_fallthru
          _
        // Predicated region
        $region17: #{tpu_custom_call.1} parent=11 // pred_check
          %p221 = pneg %p120
        $region18: #{tpu_custom_call.1} parent=11 // pred_check_branch
          %223 = sbr.rel (%p221) target = $region20
        $region19: #{tpu_custom_call.1} parent=11 // pred_region
          %s225 = ssub.s32 2048, 2048
          %226 = vsyncadd [#allocation9], %s225
          %s227 = sshll.u32 [#allocation8], 4
          %s228 = int_to_ptr.vmem [resolvable:$true] %s227
          %233 = dma.hbm_to_vmem [thread:$0]  %s3, 2048, %s228, [#allocation9], 128, 128, 8
        $region20: #{tpu_custom_call.1} parent=11 // pred_fallthru
          _
        // Predicated region
        $region21: #{tpu_custom_call.1} parent=11 // pred_check
          %p234 = pneg %p141
        $region22: #{tpu_custom_call.1} parent=11 // pred_check_branch
          %236 = sbr.rel (%p234) target = $region24
        $region23: #{tpu_custom_call.1} parent=11 // pred_region
          %s238 = ssub.s32 2048, 2048
          %239 = vsyncadd [#allocation9], %s238
          %s240 = sshll.u32 [#allocation10], 4
          %s241 = int_to_ptr.vmem [resolvable:$true] %s240
          %246 = dma.hbm_to_vmem [thread:$0]  %s4, 2048, %s241, [#allocation9], 128, 128, 8
        $region24: #{tpu_custom_call.1} parent=11 // pred_fallthru
          _
      $region12: #{tpu_custom_call.1} parent=5 // pred_fallthru
        _
      %p247 = scmp.lt.s32.totalorder %s26, 2
      // Predicated region
      $region25: #{tpu_custom_call.1} parent=5 // pred_check
        %p248 = pneg %p247
      $region26: #{tpu_custom_call.1} parent=5 // pred_check_branch
        %250 = sbr.rel (%p248) target = $region28
      $region27: #{tpu_custom_call.1} parent=5 // pred_region
        // Predicated region
        $region29: #{tpu_custom_call.1} parent=27 // pred_check
          %p251 = pneg %p46
        $region30: #{tpu_custom_call.1} parent=27 // pred_check_branch
          %253 = sbr.rel (%p251) target = $region32
        $region31: #{tpu_custom_call.1} parent=27 // pred_region
          %s254 = sand.u32 %s36, 1
          %s255 = scalar_lea.sflag [#allocation3], %s254
          %s256 = sand.u32 %s36, 1
          %s257 = smul.addr %s256, 8
          %s258 = scalar_lea.vmem [#allocation2], %s257
          %s260 = ssub.s32 128, 128
          %261 = vsyncadd %s255, %s260
          %s262 = smul.addr %s26, 128
          %s263 = scalar_lea.hbm %s0, %s262
          %s265 = sshll.u32 %s258, 4
          %s266 = int_to_ptr.vmem [resolvable:$true] %s265
          %268 = dma.hbm_to_vmem [thread:$0]  %s263, 128, %s266, %s255
        $region32: #{tpu_custom_call.1} parent=27 // pred_fallthru
          _
        // Predicated region
        $region33: #{tpu_custom_call.1} parent=27 // pred_check
          %p269 = pneg %p72
        $region34: #{tpu_custom_call.1} parent=27 // pred_check_branch
          %271 = sbr.rel (%p269) target = $region36
        $region35: #{tpu_custom_call.1} parent=27 // pred_region
          %s272 = sand.u32 %s26, 1
          %s273 = scalar_lea.sflag [#allocation6], %s272
          %s274 = sand.u32 %s62, 1
          %s275 = smul.addr %s274, 128
          %s276 = scalar_lea.vmem [#allocation5], %s275
          %s278 = ssub.s32 2048, 2048
          %279 = vsyncadd %s273, %s278
          %s280 = smul.addr %s26, 16
          %s281 = smul.addr %s280, 128
          %s282 = scalar_lea.hbm %s1, %s281
          %s283 = sshll.u32 %s276, 4
          %s284 = int_to_ptr.vmem [resolvable:$true] %s283
          %289 = dma.hbm_to_vmem [thread:$0]  %s282, 2048, %s284, %s273, 128, 128, 8
        $region36: #{tpu_custom_call.1} parent=27 // pred_fallthru
          _
      $region28: #{tpu_custom_call.1} parent=5 // pred_fallthru
        _
      %p290 = scmp.le.s32.totalorder 1, %s26
      %p291 = scmp.lt.s32.totalorder %s26, 3
      %p292 = pnand %p290, %p291
      %p293 = pneg %p292
      // Predicated region
      $region37: #{tpu_custom_call.1} parent=5 // pred_check
        _
      $region38: #{tpu_custom_call.1} parent=5 // pred_check_branch
        %295 = sbr.rel (%p292) target = $region40
      $region39: #{tpu_custom_call.1} parent=5 // pred_region
        %s296 = ssub.s32 %s26, 1
        %s297 = sand.u32 %s39, 1
        %s298 = scalar_lea.sflag [#allocation3], %s297
        %s299 = sand.u32 %s39, 1
        %s300 = smul.addr %s299, 8
        %s301 = scalar_lea.vmem [#allocation2], %s300
        // Predicated region
        $region41: #{tpu_custom_call.1} parent=39 // pred_check
          %p302 = pneg %p52
        $region42: #{tpu_custom_call.1} parent=39 // pred_check_branch
          %304 = sbr.rel (%p302) target = $region44
        $region43: #{tpu_custom_call.1} parent=39 // pred_region
          %305 = dma.done %s298, 128
        $region44: #{tpu_custom_call.1} parent=39 // pred_fallthru
          _
        %s306 = sand.u32 %s31, 1
        %s307 = scalar_lea.sflag [#allocation6], %s306
        %s308 = sand.u32 %s65, 1
        %s309 = smul.addr %s308, 128
        %s310 = scalar_lea.vmem [#allocation5], %s309
        // Predicated region
        $region45: #{tpu_custom_call.1} parent=39 // pred_check
          %p311 = pneg %p78
        $region46: #{tpu_custom_call.1} parent=39 // pred_check_branch
          %313 = sbr.rel (%p311) target = $region48
        $region47: #{tpu_custom_call.1} parent=39 // pred_region
          %314 = dma.done %s307, 2048
        $region48: #{tpu_custom_call.1} parent=39 // pred_fallthru
          _
        // Predicated region
        $region49: #{tpu_custom_call.1} parent=39 // pred_check
          %p315 = pneg %p99
        $region50: #{tpu_custom_call.1} parent=39 // pred_check_branch
          %317 = sbr.rel (%p315) target = $region52
        $region51: #{tpu_custom_call.1} parent=39 // pred_region
          %318 = dma.done [#allocation6], 2048
        $region52: #{tpu_custom_call.1} parent=39 // pred_fallthru
          _
        // Predicated region
        $region53: #{tpu_custom_call.1} parent=39 // pred_check
          %p319 = pneg %p120
        $region54: #{tpu_custom_call.1} parent=39 // pred_check_branch
          %321 = sbr.rel (%p319) target = $region56
        $region55: #{tpu_custom_call.1} parent=39 // pred_region
          %322 = dma.done [#allocation9], 2048
        $region56: #{tpu_custom_call.1} parent=39 // pred_fallthru
          _
        // Predicated region
        $region57: #{tpu_custom_call.1} parent=39 // pred_check
          %p323 = pneg %p141
        $region58: #{tpu_custom_call.1} parent=39 // pred_check_branch
          %325 = sbr.rel (%p323) target = $region60
        $region59: #{tpu_custom_call.1} parent=39 // pred_region
          %326 = dma.done [#allocation9], 2048
        $region60: #{tpu_custom_call.1} parent=39 // pred_fallthru
          _
        %s327 = sand.u32 %s39, 1
        %s328 = scalar_lea.sflag [#allocation3], %s327
        %s329 = sand.u32 %s39, 1
        %s330 = smul.addr %s329, 8
        %s331 = scalar_lea.vmem [#allocation2], %s330
        %p332 = pneg %p52
        %p333 = pneg %p49
        %s334 = sand.u32 %s31, 1
        %s335 = scalar_lea.sflag [#allocation6], %s334
        %s336 = sand.u32 %s65, 1
        %s337 = smul.addr %s336, 128
        %s338 = scalar_lea.vmem [#allocation5], %s337
        %p339 = pneg %p78
        %p340 = pneg %p75
        %p341 = pneg %p99
        %p342 = pneg %p96
        %p343 = pneg %p120
        %p344 = pneg %p117
        %p345 = pneg %p141
        %p346 = pneg %p138
        %p347 = pneg %p167
        %p348 = pneg %p164
        %s349 = sand.u32 %s154, 1
        %s350 = scalar_lea.sflag [#allocation4], %s349
        %s351 = sand.u32 %s154, 1
        %s352 = smul.addr %s351, 8
        %s353 = scalar_lea.vmem [#allocation11], %s352
        %p354 = pneg %p193
        %p355 = pneg %p190
        %s356 = sand.u32 %s180, 1
        %s357 = scalar_lea.sflag [#allocation13], %s356
        %s358 = sand.u32 %s180, 1
        %s359 = smul.addr %s358, 8
        %s360 = scalar_lea.vmem [#allocation12], %s359
        %v361 = vld [vmem:[%s301] sm:$0xff]
        %v362 = vld [vmem:[%s310] sm:$0xff]
        %v363 = vld [vmem:[%s310 + $0x8] sm:$0xff]
        %v364 = vld [vmem:[%s310 + $0x10] sm:$0xff]
        %v365 = vld [vmem:[%s310 + $0x18] sm:$0xff]
        %v366 = vld [vmem:[%s310 + $0x20] sm:$0xff]
        %v367 = vld [vmem:[%s310 + $0x28] sm:$0xff]
        %v368 = vld [vmem:[%s310 + $0x30] sm:$0xff]
        %v369 = vld [vmem:[%s310 + $0x38] sm:$0xff]
        %v370 = vld [vmem:[%s310 + $0x40] sm:$0xff]
        %v371 = vld [vmem:[%s310 + $0x48] sm:$0xff]
        %v372 = vld [vmem:[%s310 + $0x50] sm:$0xff]
        %v373 = vld [vmem:[%s310 + $0x58] sm:$0xff]
        %v374 = vld [vmem:[%s310 + $0x60] sm:$0xff]
        %v375 = vld [vmem:[%s310 + $0x68] sm:$0xff]
        %v376 = vld [vmem:[%s310 + $0x70] sm:$0xff]
        %v377 = vld [vmem:[%s310 + $0x78] sm:$0xff]
        %v378 = vld [vmem:[#allocation7] sm:$0xff]
        %v379 = vld [vmem:[#allocation7 + $0x8] sm:$0xff]
        %v380 = vld [vmem:[#allocation7 + $0x10] sm:$0xff]
        %v381 = vld [vmem:[#allocation7 + $0x18] sm:$0xff]
        %v382 = vld [vmem:[#allocation7 + $0x20] sm:$0xff]
        %v383 = vld [vmem:[#allocation7 + $0x28] sm:$0xff]
        %v384 = vld [vmem:[#allocation7 + $0x30] sm:$0xff]
        %v385 = vld [vmem:[#allocation7 + $0x38] sm:$0xff]
        %v386 = vld [vmem:[#allocation7 + $0x40] sm:$0xff]
        %v387 = vld [vmem:[#allocation7 + $0x48] sm:$0xff]
        %v388 = vld [vmem:[#allocation7 + $0x50] sm:$0xff]
        %v389 = vld [vmem:[#allocation7 + $0x58] sm:$0xff]
        %v390 = vld [vmem:[#allocation7 + $0x60] sm:$0xff]
        %v391 = vld [vmem:[#allocation7 + $0x68] sm:$0xff]
        %v392 = vld [vmem:[#allocation7 + $0x70] sm:$0xff]
        %v393 = vld [vmem:[#allocation7 + $0x78] sm:$0xff]
        %394 = vmatprep.subr.mxu0 0.0
        %395 = vmatpush1.msra.mxu0 %v393
        %396 = vmatprep.subr.mxu0 0.0
        %397 = vmatpush1.msra.mxu0 %v392
        %398 = vmatprep.subr.mxu0 0.0
        %399 = vmatpush1.msra.mxu0 %v391
        %400 = vmatprep.subr.mxu0 0.0
        %401 = vmatpush1.msra.mxu0 %v390
        %402 = vmatprep.subr.mxu0 0.0
        %403 = vmatpush1.msra.mxu0 %v389
        %404 = vmatprep.subr.mxu0 0.0
        %405 = vmatpush1.msra.mxu0 %v388
        %406 = vmatprep.subr.mxu0 0.0
        %407 = vmatpush1.msra.mxu0 %v387
        %408 = vmatprep.subr.mxu0 0.0
        %409 = vmatpush1.msra.mxu0 %v386
        %410 = vmatprep.subr.mxu0 0.0
        %411 = vmatpush1.msra.mxu0 %v385
        %412 = vmatprep.subr.mxu0 0.0
        %413 = vmatpush1.msra.mxu0 %v384
        %414 = vmatprep.subr.mxu0 0.0
        %415 = vmatpush1.msra.mxu0 %v383
        %416 = vmatprep.subr.mxu0 0.0
        %417 = vmatpush1.msra.mxu0 %v382
        %418 = vmatprep.subr.mxu0 0.0
        %419 = vmatpush1.msra.mxu0 %v381
        %420 = vmatprep.subr.mxu0 0.0
        %421 = vmatpush1.msra.mxu0 %v380
        %422 = vmatprep.subr.mxu0 0.0
        %423 = vmatpush1.msra.mxu0 %v379
        %424 = vmatprep.subr.mxu0 0.0
        %425 = vmatpush1.msra.mxu0 %v378
        %426 = vmatprep.subr.mxu0 0.0
        %427 = vmatpush2.msra.mxu0 0.0
        %428 = vmatprep.subr.mxu0 0.0
        %429 = vmatpush2.msra.mxu0 0.0
        %430 = vmatprep.subr.mxu0 0.0
        %431 = vmatpush2.msra.mxu0 0.0
        %432 = vmatprep.subr.mxu0 0.0
        %433 = vmatpush2.msra.mxu0 0.0
        %434 = vmatprep.subr.mxu0 0.0
        %435 = vmatpush2.msra.mxu0 0.0
        %436 = vmatprep.subr.mxu0 0.0
        %437 = vmatpush2.msra.mxu0 0.0
        %438 = vmatprep.subr.mxu0 0.0
        %439 = vmatpush2.msra.mxu0 0.0
        %440 = vmatprep.subr.mxu0 0.0
        %441 = vmatpush2.msra.mxu0 0.0
        %442 = vmatprep.subr.mxu0 0.0
        %443 = vmatpush2.msra.mxu0 0.0
        %444 = vmatprep.subr.mxu0 0.0
        %445 = vmatpush2.msra.mxu0 0.0
        %446 = vmatprep.subr.mxu0 0.0
        %447 = vmatpush2.msra.mxu0 0.0
        %448 = vmatprep.subr.mxu0 0.0
        %449 = vmatpush2.msra.mxu0 0.0
        %450 = vmatprep.subr.mxu0 0.0
        %451 = vmatpush2.msra.mxu0 0.0
        %452 = vmatprep.subr.mxu0 0.0
        %453 = vmatpush2.msra.mxu0 0.0
        %454 = vmatprep.subr.mxu0 0.0
        %455 = vmatpush2.msra.mxu0 0.0
        %456 = vmatprep.subr.mxu0 0.0
        %457 = vmatpush2.msra.mxu0 0.0
        %458 = vmatprep.mubr.f32.mxu0 0.0
        %459 = vmatmul.mubr.f32.gmra.mxu0 %v361
        %v460 = vpop.f32.mrf.mxu0
        %v461 = vadd.f32 0.0, %v460
        %v462 = vpop.f32.mrf.mxu0
        %463 = vdwg.mxu0
        %464 = vmatprep.subr.mxu0 0.0
        %465 = vmatpush1.xpose.msra.mxu0 %v377
        %466 = vmatprep.subr.mxu0 0.0
        %467 = vmatpush1.xpose.msra.mxu0 %v376
        %468 = vmatprep.subr.mxu0 0.0
        %469 = vmatpush1.xpose.msra.mxu0 %v375
        %470 = vmatprep.subr.mxu0 0.0
        %471 = vmatpush1.xpose.msra.mxu0 %v374
        %472 = vmatprep.subr.mxu0 0.0
        %473 = vmatpush1.xpose.msra.mxu0 %v373
        %474 = vmatprep.subr.mxu0 0.0
        %475 = vmatpush1.xpose.msra.mxu0 %v372
        %476 = vmatprep.subr.mxu0 0.0
        %477 = vmatpush1.xpose.msra.mxu0 %v371
        %478 = vmatprep.subr.mxu0 0.0
        %479 = vmatpush1.xpose.msra.mxu0 %v370
        %480 = vmatprep.subr.mxu0 0.0
        %481 = vmatpush1.xpose.msra.mxu0 %v369
        %482 = vmatprep.subr.mxu0 0.0
        %483 = vmatpush1.xpose.msra.mxu0 %v368
        %484 = vmatprep.subr.mxu0 0.0
        %485 = vmatpush1.xpose.msra.mxu0 %v367
        %486 = vmatprep.subr.mxu0 0.0
        %487 = vmatpush1.xpose.msra.mxu0 %v366
        %488 = vmatprep.subr.mxu0 0.0
        %489 = vmatpush1.xpose.msra.mxu0 %v365
        %490 = vmatprep.subr.mxu0 0.0
        %491 = vmatpush1.xpose.msra.mxu0 %v364
        %492 = vmatprep.subr.mxu0 0.0
        %493 = vmatpush1.xpose.msra.mxu0 %v363
        %494 = vmatprep.subr.mxu0 0.0
        %495 = vmatpush1.xpose.msra.mxu0 %v362
        %496 = vmatprep.subr.mxu0 0.0
        %497 = vmatpush2.xpose.msra.mxu0 0.0
        %498 = vmatprep.subr.mxu0 0.0
        %499 = vmatpush2.xpose.msra.mxu0 0.0
        %500 = vmatprep.subr.mxu0 0.0
        %501 = vmatpush2.xpose.msra.mxu0 0.0
        %502 = vmatprep.subr.mxu0 0.0
        %503 = vmatpush2.xpose.msra.mxu0 0.0
        %504 = vmatprep.subr.mxu0 0.0
        %505 = vmatpush2.xpose.msra.mxu0 0.0
        %506 = vmatprep.subr.mxu0 0.0
        %507 = vmatpush2.xpose.msra.mxu0 0.0
        %508 = vmatprep.subr.mxu0 0.0
        %509 = vmatpush2.xpose.msra.mxu0 0.0
        %510 = vmatprep.subr.mxu0 0.0
        %511 = vmatpush2.xpose.msra.mxu0 0.0
        %512 = vmatprep.subr.mxu0 0.0
        %513 = vmatpush2.xpose.msra.mxu0 0.0
        %514 = vmatprep.subr.mxu0 0.0
        %515 = vmatpush2.xpose.msra.mxu0 0.0
        %516 = vmatprep.subr.mxu0 0.0
        %517 = vmatpush2.xpose.msra.mxu0 0.0
        %518 = vmatprep.subr.mxu0 0.0
        %519 = vmatpush2.xpose.msra.mxu0 0.0
        %520 = vmatprep.subr.mxu0 0.0
        %521 = vmatpush2.xpose.msra.mxu0 0.0
        %522 = vmatprep.subr.mxu0 0.0
        %523 = vmatpush2.xpose.msra.mxu0 0.0
        %524 = vmatprep.subr.mxu0 0.0
        %525 = vmatpush2.xpose.msra.mxu0 0.0
        %526 = vmatprep.subr.mxu0 0.0
        %527 = vmatpush2.xpose.msra.mxu0 0.0
        %528 = vmatprep.mubr.f32.mxu0 0.0
        %529 = vmatmul.mubr.f32.gmra.mxu0 %v461
        %v530 = vpop.f32.mrf.mxu0
        %v531 = vadd.f32 0.0, %v530
        %v532 = vpop.f32.mrf.mxu0
        %533 = vdwg.mxu0
        %v534 = vlaneseq
        %v535 = vand.u32 %v534, 127
        %vm536 = vcmp.lt.s32.totalorder %v535, 8
        %v537 = vsel %vm536, %v531, -1e+30
        %538 = vmax.xlane.f32.xlu0 %v537
        %v539 = vpop.xlane.xlu0 %538
        %v540 = vsub.f32 %v537, %v539
        %v541 = vmul.f32 %v540, 1.442695
        %v542 = vpow.pop %v541
        %543 = vadd.xlane.f32.xlu0 %v542
        %v544 = vpop.xlane.xlu0 %543
        %v545 = vrcp.pop %v544
        %v546 = vmul.f32 %v542, %v545
        %547 = vst [vmem:[%s360] sm:$0xff] %v546
        %548 = vmatprep.subr.mxu0 0.0
        %549 = vmatpush1.msra.mxu0 %v377
        %550 = vmatprep.subr.mxu0 0.0
        %551 = vmatpush1.msra.mxu0 %v376
        %552 = vmatprep.subr.mxu0 0.0
        %553 = vmatpush1.msra.mxu0 %v375
        %554 = vmatprep.subr.mxu0 0.0
        %555 = vmatpush1.msra.mxu0 %v374
        %556 = vmatprep.subr.mxu0 0.0
        %557 = vmatpush1.msra.mxu0 %v373
        %558 = vmatprep.subr.mxu0 0.0
        %559 = vmatpush1.msra.mxu0 %v372
        %560 = vmatprep.subr.mxu0 0.0
        %561 = vmatpush1.msra.mxu0 %v371
        %562 = vmatprep.subr.mxu0 0.0
        %563 = vmatpush1.msra.mxu0 %v370
        %564 = vmatprep.subr.mxu0 0.0
        %565 = vmatpush1.msra.mxu0 %v369
        %566 = vmatprep.subr.mxu0 0.0
        %567 = vmatpush1.msra.mxu0 %v368
        %568 = vmatprep.subr.mxu0 0.0
        %569 = vmatpush1.msra.mxu0 %v367
        %570 = vmatprep.subr.mxu0 0.0
        %571 = vmatpush1.msra.mxu0 %v366
        %572 = vmatprep.subr.mxu0 0.0
        %573 = vmatpush1.msra.mxu0 %v365
        %574 = vmatprep.subr.mxu0 0.0
        %575 = vmatpush1.msra.mxu0 %v364
        %576 = vmatprep.subr.mxu0 0.0
        %577 = vmatpush1.msra.mxu0 %v363
        %578 = vmatprep.subr.mxu0 0.0
        %579 = vmatpush1.msra.mxu0 %v362
        %580 = vmatprep.subr.mxu0 0.0
        %581 = vmatpush2.msra.mxu0 0.0
        %582 = vmatprep.subr.mxu0 0.0
        %583 = vmatpush2.msra.mxu0 0.0
        %584 = vmatprep.subr.mxu0 0.0
        %585 = vmatpush2.msra.mxu0 0.0
        %586 = vmatprep.subr.mxu0 0.0
        %587 = vmatpush2.msra.mxu0 0.0
        %588 = vmatprep.subr.mxu0 0.0
        %589 = vmatpush2.msra.mxu0 0.0
        %590 = vmatprep.subr.mxu0 0.0
        %591 = vmatpush2.msra.mxu0 0.0
        %592 = vmatprep.subr.mxu0 0.0
        %593 = vmatpush2.msra.mxu0 0.0
        %594 = vmatprep.subr.mxu0 0.0
        %595 = vmatpush2.msra.mxu0 0.0
        %596 = vmatprep.subr.mxu0 0.0
        %597 = vmatpush2.msra.mxu0 0.0
        %598 = vmatprep.subr.mxu0 0.0
        %599 = vmatpush2.msra.mxu0 0.0
        %600 = vmatprep.subr.mxu0 0.0
        %601 = vmatpush2.msra.mxu0 0.0
        %602 = vmatprep.subr.mxu0 0.0
        %603 = vmatpush2.msra.mxu0 0.0
        %604 = vmatprep.subr.mxu0 0.0
        %605 = vmatpush2.msra.mxu0 0.0
        %606 = vmatprep.subr.mxu0 0.0
        %607 = vmatpush2.msra.mxu0 0.0
        %608 = vmatprep.subr.mxu0 0.0
        %609 = vmatpush2.msra.mxu0 0.0
        %610 = vmatprep.subr.mxu0 0.0
        %611 = vmatpush2.msra.mxu0 0.0
        %612 = vmatprep.mubr.f32.mxu0 0.0
        %613 = vmatmul.mubr.f32.gmra.mxu0 %v546
        %v614 = vpop.f32.mrf.mxu0
        %v615 = vadd.f32 0.0, %v614
        %v616 = vpop.f32.mrf.mxu0
        %617 = vdwg.mxu0
        %v618 = vld [vmem:[#allocation8] sm:$0xff]
        %v619 = vld [vmem:[#allocation8 + $0x8] sm:$0xff]
        %v620 = vld [vmem:[#allocation8 + $0x10] sm:$0xff]
        %v621 = vld [vmem:[#allocation8 + $0x18] sm:$0xff]
        %v622 = vld [vmem:[#allocation8 + $0x20] sm:$0xff]
        %v623 = vld [vmem:[#allocation8 + $0x28] sm:$0xff]
        %v624 = vld [vmem:[#allocation8 + $0x30] sm:$0xff]
        %v625 = vld [vmem:[#allocation8 + $0x38] sm:$0xff]
        %v626 = vld [vmem:[#allocation8 + $0x40] sm:$0xff]
        %v627 = vld [vmem:[#allocation8 + $0x48] sm:$0xff]
        %v628 = vld [vmem:[#allocation8 + $0x50] sm:$0xff]
        %v629 = vld [vmem:[#allocation8 + $0x58] sm:$0xff]
        %v630 = vld [vmem:[#allocation8 + $0x60] sm:$0xff]
        %v631 = vld [vmem:[#allocation8 + $0x68] sm:$0xff]
        %v632 = vld [vmem:[#allocation8 + $0x70] sm:$0xff]
        %v633 = vld [vmem:[#allocation8 + $0x78] sm:$0xff]
        %v634 = vld [vmem:[#allocation10] sm:$0xff]
        %v635 = vld [vmem:[#allocation10 + $0x8] sm:$0xff]
        %v636 = vld [vmem:[#allocation10 + $0x10] sm:$0xff]
        %v637 = vld [vmem:[#allocation10 + $0x18] sm:$0xff]
        %v638 = vld [vmem:[#allocation10 + $0x20] sm:$0xff]
        %v639 = vld [vmem:[#allocation10 + $0x28] sm:$0xff]
        %v640 = vld [vmem:[#allocation10 + $0x30] sm:$0xff]
        %v641 = vld [vmem:[#allocation10 + $0x38] sm:$0xff]
        %v642 = vld [vmem:[#allocation10 + $0x40] sm:$0xff]
        %v643 = vld [vmem:[#allocation10 + $0x48] sm:$0xff]
        %v644 = vld [vmem:[#allocation10 + $0x50] sm:$0xff]
        %v645 = vld [vmem:[#allocation10 + $0x58] sm:$0xff]
        %v646 = vld [vmem:[#allocation10 + $0x60] sm:$0xff]
        %v647 = vld [vmem:[#allocation10 + $0x68] sm:$0xff]
        %v648 = vld [vmem:[#allocation10 + $0x70] sm:$0xff]
        %v649 = vld [vmem:[#allocation10 + $0x78] sm:$0xff]
        %650 = vmatprep.subr.mxu0 0.0
        %651 = vmatpush1.msra.mxu0 %v649
        %652 = vmatprep.subr.mxu0 0.0
        %653 = vmatpush1.msra.mxu0 %v648
        %654 = vmatprep.subr.mxu0 0.0
        %655 = vmatpush1.msra.mxu0 %v647
        %656 = vmatprep.subr.mxu0 0.0
        %657 = vmatpush1.msra.mxu0 %v646
        %658 = vmatprep.subr.mxu0 0.0
        %659 = vmatpush1.msra.mxu0 %v645
        %660 = vmatprep.subr.mxu0 0.0
        %661 = vmatpush1.msra.mxu0 %v644
        %662 = vmatprep.subr.mxu0 0.0
        %663 = vmatpush1.msra.mxu0 %v643
        %664 = vmatprep.subr.mxu0 0.0
        %665 = vmatpush1.msra.mxu0 %v642
        %666 = vmatprep.subr.mxu0 0.0
        %667 = vmatpush1.msra.mxu0 %v641
        %668 = vmatprep.subr.mxu0 0.0
        %669 = vmatpush1.msra.mxu0 %v640
        %670 = vmatprep.subr.mxu0 0.0
        %671 = vmatpush1.msra.mxu0 %v639
        %672 = vmatprep.subr.mxu0 0.0
        %673 = vmatpush1.msra.mxu0 %v638
        %674 = vmatprep.subr.mxu0 0.0
        %675 = vmatpush1.msra.mxu0 %v637
        %676 = vmatprep.subr.mxu0 0.0
        %677 = vmatpush1.msra.mxu0 %v636
        %678 = vmatprep.subr.mxu0 0.0
        %679 = vmatpush1.msra.mxu0 %v635
        %680 = vmatprep.subr.mxu0 0.0
        %681 = vmatpush1.msra.mxu0 %v634
        %682 = vmatprep.subr.mxu0 0.0
        %683 = vmatpush2.msra.mxu0 0.0
        %684 = vmatprep.subr.mxu0 0.0
        %685 = vmatpush2.msra.mxu0 0.0
        %686 = vmatprep.subr.mxu0 0.0
        %687 = vmatpush2.msra.mxu0 0.0
        %688 = vmatprep.subr.mxu0 0.0
        %689 = vmatpush2.msra.mxu0 0.0
        %690 = vmatprep.subr.mxu0 0.0
        %691 = vmatpush2.msra.mxu0 0.0
        %692 = vmatprep.subr.mxu0 0.0
        %693 = vmatpush2.msra.mxu0 0.0
        %694 = vmatprep.subr.mxu0 0.0
        %695 = vmatpush2.msra.mxu0 0.0
        %696 = vmatprep.subr.mxu0 0.0
        %697 = vmatpush2.msra.mxu0 0.0
        %698 = vmatprep.subr.mxu0 0.0
        %699 = vmatpush2.msra.mxu0 0.0
        %700 = vmatprep.subr.mxu0 0.0
        %701 = vmatpush2.msra.mxu0 0.0
        %702 = vmatprep.subr.mxu0 0.0
        %703 = vmatpush2.msra.mxu0 0.0
        %704 = vmatprep.subr.mxu0 0.0
        %705 = vmatpush2.msra.mxu0 0.0
        %706 = vmatprep.subr.mxu0 0.0
        %707 = vmatpush2.msra.mxu0 0.0
        %708 = vmatprep.subr.mxu0 0.0
        %709 = vmatpush2.msra.mxu0 0.0
        %710 = vmatprep.subr.mxu0 0.0
        %711 = vmatpush2.msra.mxu0 0.0
        %712 = vmatprep.subr.mxu0 0.0
        %713 = vmatpush2.msra.mxu0 0.0
        %714 = vmatprep.mubr.f32.mxu0 0.0
        %715 = vmatmul.mubr.f32.gmra.mxu0 %v361
        %v716 = vpop.f32.mrf.mxu0
        %v717 = vadd.f32 0.0, %v716
        %v718 = vpop.f32.mrf.mxu0
        %719 = vdwg.mxu0
        %720 = vmatprep.subr.mxu0 0.0
        %721 = vmatpush1.msra.mxu0 %v633
        %722 = vmatprep.subr.mxu0 0.0
        %723 = vmatpush1.msra.mxu0 %v632
        %724 = vmatprep.subr.mxu0 0.0
        %725 = vmatpush1.msra.mxu0 %v631
        %726 = vmatprep.subr.mxu0 0.0
        %727 = vmatpush1.msra.mxu0 %v630
        %728 = vmatprep.subr.mxu0 0.0
        %729 = vmatpush1.msra.mxu0 %v629
        %730 = vmatprep.subr.mxu0 0.0
        %731 = vmatpush1.msra.mxu0 %v628
        %732 = vmatprep.subr.mxu0 0.0
        %733 = vmatpush1.msra.mxu0 %v627
        %734 = vmatprep.subr.mxu0 0.0
        %735 = vmatpush1.msra.mxu0 %v626
        %736 = vmatprep.subr.mxu0 0.0
        %737 = vmatpush1.msra.mxu0 %v625
        %738 = vmatprep.subr.mxu0 0.0
        %739 = vmatpush1.msra.mxu0 %v624
        %740 = vmatprep.subr.mxu0 0.0
        %741 = vmatpush1.msra.mxu0 %v623
        %742 = vmatprep.subr.mxu0 0.0
        %743 = vmatpush1.msra.mxu0 %v622
        %744 = vmatprep.subr.mxu0 0.0
        %745 = vmatpush1.msra.mxu0 %v621
        %746 = vmatprep.subr.mxu0 0.0
        %747 = vmatpush1.msra.mxu0 %v620
        %748 = vmatprep.subr.mxu0 0.0
        %749 = vmatpush1.msra.mxu0 %v619
        %750 = vmatprep.subr.mxu0 0.0
        %751 = vmatpush1.msra.mxu0 %v618
        %752 = vmatprep.subr.mxu0 0.0
        %753 = vmatpush2.msra.mxu0 0.0
        %754 = vmatprep.subr.mxu0 0.0
        %755 = vmatpush2.msra.mxu0 0.0
        %756 = vmatprep.subr.mxu0 0.0
        %757 = vmatpush2.msra.mxu0 0.0
        %758 = vmatprep.subr.mxu0 0.0
        %759 = vmatpush2.msra.mxu0 0.0
        %760 = vmatprep.subr.mxu0 0.0
        %761 = vmatpush2.msra.mxu0 0.0
        %762 = vmatprep.subr.mxu0 0.0
        %763 = vmatpush2.msra.mxu0 0.0
        %764 = vmatprep.subr.mxu0 0.0
        %765 = vmatpush2.msra.mxu0 0.0
        %766 = vmatprep.subr.mxu0 0.0
        %767 = vmatpush2.msra.mxu0 0.0
        %768 = vmatprep.subr.mxu0 0.0
        %769 = vmatpush2.msra.mxu0 0.0
        %770 = vmatprep.subr.mxu0 0.0
        %771 = vmatpush2.msra.mxu0 0.0
        %772 = vmatprep.subr.mxu0 0.0
        %773 = vmatpush2.msra.mxu0 0.0
        %774 = vmatprep.subr.mxu0 0.0
        %775 = vmatpush2.msra.mxu0 0.0
        %776 = vmatprep.subr.mxu0 0.0
        %777 = vmatpush2.msra.mxu0 0.0
        %778 = vmatprep.subr.mxu0 0.0
        %779 = vmatpush2.msra.mxu0 0.0
        %780 = vmatprep.subr.mxu0 0.0
        %781 = vmatpush2.msra.mxu0 0.0
        %782 = vmatprep.subr.mxu0 0.0
        %783 = vmatpush2.msra.mxu0 0.0
        %784 = vmatprep.mubr.f32.mxu0 0.0
        %785 = vmatmul.mubr.f32.gmra.mxu0 %v615
        %v786 = vpop.f32.mrf.mxu0
        %v787 = vadd.f32 %v717, %v786
        %v788 = vpop.f32.mrf.mxu0
        %789 = vdwg.mxu0
        %v790 = vtanh.pop %v787
        %791 = vst [vmem:[%s353] sm:$0xff] %v790
        %s792 = sand.u32 %s154, 1
        %s793 = scalar_lea.sflag [#allocation4], %s792
        %s794 = sand.u32 %s154, 1
        %s795 = smul.addr %s794, 8
        %s796 = scalar_lea.vmem [#allocation11], %s795
        %s797 = sand.u32 %s180, 1
        %s798 = scalar_lea.sflag [#allocation13], %s797
        %s799 = sand.u32 %s180, 1
        %s800 = smul.addr %s799, 8
        %s801 = scalar_lea.vmem [#allocation12], %s800
        // Predicated region
        $region61: #{tpu_custom_call.1} parent=39 // pred_check
          %p802 = pneg %p164
        $region62: #{tpu_custom_call.1} parent=39 // pred_check_branch
          %804 = sbr.rel (%p802) target = $region64
        $region63: #{tpu_custom_call.1} parent=39 // pred_region
          %s806 = ssub.s32 128, 128
          %807 = vsyncadd %s793, %s806
          %s808 = smul.addr %s31, 128
          %s809 = scalar_lea.hbm %s5, %s808
          %s811 = sshll.u32 %s796, 4
          %s812 = int_to_ptr.vmem [resolvable:$true] %s811
          %814 = dma.vmem_to_hbm [thread:$0]  %s812, 128, %s809, %s793
        $region64: #{tpu_custom_call.1} parent=39 // pred_fallthru
          _
        // Predicated region
        $region65: #{tpu_custom_call.1} parent=39 // pred_check
          %p815 = pneg %p190
        $region66: #{tpu_custom_call.1} parent=39 // pred_check_branch
          %817 = sbr.rel (%p815) target = $region68
        $region67: #{tpu_custom_call.1} parent=39 // pred_region
          %s819 = ssub.s32 128, 128
          %820 = vsyncadd %s798, %s819
          %s821 = smul.addr %s31, 128
          %s822 = scalar_lea.hbm %s6, %s821
          %s824 = sshll.u32 %s801, 4
          %s825 = int_to_ptr.vmem [resolvable:$true] %s824
          %827 = dma.vmem_to_hbm [thread:$0]  %s825, 128, %s822, %s798
        $region68: #{tpu_custom_call.1} parent=39 // pred_fallthru
          _
      $region40: #{tpu_custom_call.1} parent=5 // pred_fallthru
        _
      %p828 = scmp.le.s32.totalorder 2, %s26
      // Predicated region
      $region69: #{tpu_custom_call.1} parent=5 // pred_check
        %p829 = pneg %p828
      $region70: #{tpu_custom_call.1} parent=5 // pred_check_branch
        %831 = sbr.rel (%p829) target = $region72
      $region71: #{tpu_custom_call.1} parent=5 // pred_region
        %s832 = ssub.s32 %s26, 2
        // Predicated region
        $region73: #{tpu_custom_call.1} parent=71 // pred_check
          %p833 = pneg %p170
        $region74: #{tpu_custom_call.1} parent=71 // pred_check_branch
          %835 = sbr.rel (%p833) target = $region76
        $region75: #{tpu_custom_call.1} parent=71 // pred_region
          %s836 = sand.u32 %s155, 1
          %s837 = scalar_lea.sflag [#allocation4], %s836
          %s838 = sand.u32 %s155, 1
          %s839 = smul.addr %s838, 8
          %s840 = scalar_lea.vmem [#allocation11], %s839
          %841 = dma.done %s837, 128
        $region76: #{tpu_custom_call.1} parent=71 // pred_fallthru
          _
        // Predicated region
        $region77: #{tpu_custom_call.1} parent=71 // pred_check
          %p842 = pneg %p196
        $region78: #{tpu_custom_call.1} parent=71 // pred_check_branch
          %844 = sbr.rel (%p842) target = $region80
        $region79: #{tpu_custom_call.1} parent=71 // pred_region
          %s845 = sand.u32 %s181, 1
          %s846 = scalar_lea.sflag [#allocation13], %s845
          %s847 = sand.u32 %s181, 1
          %s848 = smul.addr %s847, 8
          %s849 = scalar_lea.vmem [#allocation12], %s848
          %850 = dma.done %s846, 128
        $region80: #{tpu_custom_call.1} parent=71 // pred_fallthru
          _
      $region72: #{tpu_custom_call.1} parent=5 // pred_fallthru
        _
    $region6: #{tpu_custom_call.1} parent=1 // loop_footer
      %s30 = sadd.s32 1, %s26
    $region7: #{tpu_custom_call.1} parent=1 // loop_footer_branch
      %25 = sbr.rel target = $region3
    $region8: #{tpu_custom_call.1} parent=1 // loop_exit
      _
    %851 = vsyncpa [#allocation3], 1
    %s852 = scalar_lea.sflag [#allocation3], 1
    %853 = vsyncpa %s852, 1
    %854 = vsyncpa [#allocation6], 1
    %s855 = scalar_lea.sflag [#allocation6], 1
    %856 = vsyncpa %s855, 1
    %857 = vsyncpa [#allocation9], 1
    %858 = vsyncpa [#allocation4], 1
    %s859 = scalar_lea.sflag [#allocation4], 1
    %860 = vsyncpa %s859, 1
    %861 = vsyncpa [#allocation13], 1
    %s862 = scalar_lea.sflag [#allocation13], 1
    %863 = vsyncpa %s862, 1

</llo_original>
